<compile_context>
chip_gen: v7x
topology: tpu7x:2x2x1
jax: 0.10.0
libtpu: 0.0.40
codegen_flags: <defaults>
</compile_context>

<pallas_src>
import jax
import jax.numpy as jnp
from jax.experimental import pallas as pl
from jax.experimental.pallas import tpu as pltpu


def _round_up(n, m):
    return ((n + m - 1) // m) * m


# ----------------------------------------------------------------------------
# Kernel 1: spk_proj (Linear out_channel -> context_dim) fused with ref_mask.
# Grid = (B, row-tiles of Lr);Resident weight/bias; mask from ref_len in SMEM.
# ----------------------------------------------------------------------------
def _spk_proj_kernel(ref_len_ref, ref_ref, w_ref, bias_ref, out_ref):
    # ref_len_ref: SMEM (B,) int32
    # ref_ref: (1, tl, Cin)  w_ref: (Cin, Cp)  bias_ref: (1, Cp)  out_ref: (1, tl, Cp)
    bi = pl.program_id(0)
    li = pl.program_id(1)
    tl = ref_ref.shape[1]
    y = jnp.dot(ref_ref[0], w_ref[...], preferred_element_type=jnp.float32)
    y = y + bias_ref[...]                                  # bias rides in VPU slack
    pos = li * tl + jax.lax.broadcasted_iota(jnp.int32, (tl, 1), 0)
    y = jnp.where(pos < ref_len_ref[bi], y, jnp.zeros_like(y))   # in-kernel ref_mask
    out_ref[0] = y.astype(out_ref.dtype)


def spk_proj_masked(reference, ref_len, w, bias, *, tl=None, mxu_dtype=None):
    """reference: (B, Lr, Cin); ref_len: (B,) int; w: (Cin, Cctx); bias: (1, Cctx)."""
    B, Lr, Cin = reference.shape
    Cctx = w.shape[1]
    out_dtype = reference.dtype

    # Lane-dense output: pad the context dim of the (small) weight/bias to a
    # multiple of 128; activations are never padded (no extra HBM copies).
    Cp = _round_up(Cctx, 128)
    if Cp != Cctx:
        w = jnp.pad(w, ((0, 0), (0, Cp - Cctx)))
        bias = jnp.pad(bias, ((0, 0), (0, Cp - Cctx)))

    # Optional bf16 MXU operands (native MXU dtype, half the operand DMA bytes);
    # accumulation stays f32 and the output keeps the input dtype.
    if mxu_dtype is not None and jnp.dtype(mxu_dtype) != reference.dtype:
        reference = reference.astype(mxu_dtype)
        w = w.astype(mxu_dtype)
    bias = bias.astype(jnp.float32)

    if tl is None:
        tl = min(Lr, 1024)
        # v7x has 2 TensorCores: make sure some parallel grid axis has extent >= 2.
        if B == 1 and Lr >= 16:
            tl = min(tl, _round_up(pl.cdiv(Lr, 2), 8))
    tl = min(tl, Lr)
    n_l = pl.cdiv(Lr, tl)

    in_itm = jnp.dtype(reference.dtype).itemsize
    out_itm = jnp.dtype(out_dtype).itemsize
    est = 2 * (tl * Cin * in_itm + Cin * Cp * in_itm + Cp * 4 + tl * Cp * out_itm)
    vmem_limit = int(max(32 * 2 ** 20, est + (4 << 20)))

    out = pl.pallas_call(
        _spk_proj_kernel,
        out_shape=jax.ShapeDtypeStruct((B, Lr, Cp), out_dtype),
        grid_spec=pltpu.PrefetchScalarGridSpec(
            num_scalar_prefetch=1,                       # ref_len -> SMEM
            grid=(B, n_l),
            in_specs=[
                pl.BlockSpec((1, tl, Cin), lambda bi, li, rl: (bi, li, 0)),
                pl.BlockSpec((Cin, Cp), lambda bi, li, rl: (0, 0)),   # resident weight
                pl.BlockSpec((1, Cp), lambda bi, li, rl: (0, 0)),     # resident bias
            ],
            out_specs=pl.BlockSpec((1, tl, Cp), lambda bi, li, rl: (bi, li, 0)),
        ),
        compiler_params=pltpu.CompilerParams(
            dimension_semantics=("parallel", "parallel"),
            vmem_limit_bytes=vmem_limit),
    )(ref_len.astype(jnp.int32), reference, w, bias)

    if Cp != Cctx:
        out = out[..., :Cctx]
    return out


# ----------------------------------------------------------------------------
# Kernel 2: UViT stand-in.  Masked identity over (B, L, C) with the x buffer
# aliased to the output; only boundary / fully-padded tiles touch HBM.
# ----------------------------------------------------------------------------
def _make_uvit_standin_kernel(tl, n_l, rem):
    def kernel(x_len_ref, x_hbm, ctx_hbm, out_hbm, buf, sem):
        # x_len_ref: SMEM (B,)   x_hbm/out_hbm: (B, L, C) in HBM (aliased)
        # ctx_hbm:   (B, Lr, Cctx) in HBM -- unused here (keeps spk_proj live).
        # TODO(synk): UViT (`self.model`) architecture is not provided in the
        # source; the real model would DMA + cross-attend to ctx_hbm.
        del ctx_hbm
        bi = pl.program_id(0)
        li = pl.program_id(1)
        start = li * tl
        xlen = x_len_ref[bi]

        def process(size):
            # `size` is a static row count (tl for full tiles, rem for the tail).
            @pl.when(start >= xlen)               # tile fully past x_len -> zeros
            def _():
                buf[...] = jnp.zeros(buf.shape, buf.dtype)
                cp = pltpu.make_async_copy(
                    buf.at[pl.ds(0, size)],
                    out_hbm.at[bi, pl.ds(start, size)], sem)
                cp.start()
                cp.wait()

            @pl.when(jnp.logical_and(start < xlen, start + size > xlen))  # boundary
            def _():
                cp_in = pltpu.make_async_copy(
                    x_hbm.at[bi, pl.ds(start, size)],
                    buf.at[pl.ds(0, size)], sem)
                cp_in.start()
                cp_in.wait()
                pos = start + jax.lax.broadcasted_iota(jnp.int32, (buf.shape[0], 1), 0)
                vals = buf[...]
                buf[...] = jnp.where(pos < xlen, vals, jnp.zeros_like(vals))
                cp_out = pltpu.make_async_copy(
                    buf.at[pl.ds(0, size)],
                    out_hbm.at[bi, pl.ds(start, size)], sem)
                cp_out.start()
                cp_out.wait()

            # Fully-valid tile (start + size <= xlen): do nothing at all --
            # x is aliased to the output, so the data is already in place.

        if rem == tl:
            process(tl)
        else:
            @pl.when(li < n_l - 1)
            def _():
                process(tl)

            @pl.when(li == n_l - 1)
            def _():
                process(rem)

    return kernel


def uvit_standin(x, x_len, context, *, tl=None):
    B, L, C = x.shape
    itemsize = jnp.dtype(x.dtype).itemsize
    if tl is None:
        # Bounded tile: <= 2048 rows and <= ~8 MiB of VMEM scratch.
        budget_rows = max(8, int((8 * 2 ** 20) // max(C * itemsize, 1)))
        tl = min(L, 2048, budget_rows)
        if tl < L:
            tl = max(8, (tl // 8) * 8)
    tl = min(tl, L)
    n_l = pl.cdiv(L, tl)
    rem = L - (n_l - 1) * tl
    # TODO(synk): for very short L with very large B, collapse to a (B*L, C)
    # row axis to amortize the ~0.35us/step grid overhead.

    kernel = _make_uvit_standin_kernel(tl, n_l, rem)
    return pl.pallas_call(
        kernel,
        out_shape=jax.ShapeDtypeStruct((B, L, C), x.dtype),
        grid_spec=pltpu.PrefetchScalarGridSpec(
            num_scalar_prefetch=1,                      # x_len -> SMEM
            grid=(B, n_l),
            in_specs=[
                pl.BlockSpec(memory_space=pl.ANY),      # x (aliased to the output)
                pl.BlockSpec(memory_space=pl.ANY),      # context: live, zero DMA/VMEM
            ],
            out_specs=pl.BlockSpec(memory_space=pl.ANY),
            scratch_shapes=[
                pltpu.VMEM((tl, C), x.dtype),
                pltpu.SemaphoreType.DMA,
            ],
        ),
        # Operand 0 is the scalar-prefetched x_len; operand 1 is x -> alias x to out 0.
        input_output_aliases={1: 0},
        compiler_params=pltpu.CompilerParams(
            dimension_semantics=("parallel", "parallel"),
            vmem_limit_bytes=int(max(32 * 2 ** 20, 2 * tl * C * itemsize + (1 << 20)))),
    )(x_len.astype(jnp.int32), x, context)


# ----------------------------------------------------------------------------
# Forward pass (mirrors SoloSpeech_Disc.forward)
# ----------------------------------------------------------------------------
def create_mask(x, lengths):
    # x: (B, L, C), lengths: (B,)  -> bool mask (B, L)
    _, L, _ = x.shape
    return jnp.arange(L)[None, :] < lengths[:, None]


def solospeech_disc_forward(x, reference, x_len, ref_len, params, *, mxu_dtype=None):
    # `.clone()` is a no-op under JAX value semantics.
    x_mask = create_mask(x, x_len)                # (B, L) bool
    # ref_mask is applied inside the spk_proj kernel directly from ref_len
    # (scalar prefetch) -- the boolean (B, Lr) mask is never materialized in HBM.
    ref = spk_proj_masked(reference, ref_len,
                          params["spk_proj_w"], params["spk_proj_b"],
                          mxu_dtype=mxu_dtype)

    # TODO(synk): ViT (`self.spk_model`) architecture is not provided in the
    # source; the projected + masked reference is passed through unchanged.

    # TODO(synk): UViT (`self.model`) architecture is not provided in the source.
    # The stand-in keeps the (B, L, C) layout (the transpose(1,2)/transpose(1,2)
    # pair of the PyTorch code cancels for a layout-agnostic stand-in), takes
    # `ref` as context through an ANY-space operand (keeps spk_proj live, zero
    # cost), honors x_mask, and preserves shape.
    x_out = uvit_standin(x, x_len, ref)

    return x_out, x_mask


# ----------------------------------------------------------------------------
# Deterministic parameter construction + demo run with reference checks
# ----------------------------------------------------------------------------
def init_params(key, out_channel, context_dim):
    kw, kb = jax.random.split(key)
    scale = 1.0 / (out_channel ** 0.5)
    # Stored pre-transposed: (out_channel, context_dim) so kernel computes ref @ W + b.
    w = jax.random.uniform(kw, (out_channel, context_dim), jnp.float32, -scale, scale)
    b = jax.random.uniform(kb, (1, context_dim), jnp.float32, -scale, scale)
    return {"spk_proj_w": w, "spk_proj_b": b}


if __name__ == "__main__":
    key = jax.random.PRNGKey(0)
    k_x, k_ref, k_p = jax.random.split(key, 3)

    B = 2
    L = 20             # x sequence length (non-multiple of 8 -> exercises tail tile)
    Lr = 16            # reference sequence length
    out_channel = 128  # uvit out_chans == feature dim of x and reference (lane-dense)
    context_dim = 128  # spk_proj output dim (lane-dense)

    x = jax.random.normal(k_x, (B, L, out_channel), jnp.float32)
    reference = jax.random.normal(k_ref, (B, Lr, out_channel), jnp.float32)
    x_len = jnp.array([20, 11], dtype=jnp.int32)
    ref_len = jnp.array([16, 9], dtype=jnp.int32)

    params = init_params(k_p, out_channel, context_dim)

    fwd = jax.jit(solospeech_disc_forward)
    x_out, x_mask = fwd(x, reference, x_len, ref_len, params)
    jax.block_until_ready((x_out, x_mask))

    # --- pure-JAX references + tolerance asserts ---
    x_mask_ref = jnp.arange(L)[None, :] < x_len[:, None]
    x_out_ref = jnp.where(x_mask_ref[:, :, None], x, 0.0)
    assert x_out.shape == (B, L, out_channel)
    assert x_mask.shape == (B, L) and x_mask.dtype == jnp.bool_
    assert jnp.array_equal(x_mask, x_mask_ref)
    assert jnp.allclose(x_out, x_out_ref, atol=1e-6), "uvit stand-in mismatch"

    # Exercise the multi-tile + ragged-tail + fully-padded-tile paths explicitly.
    ctx_dummy = jnp.zeros((B, Lr, context_dim), jnp.float32)
    x_out_tiled = jax.jit(lambda a, n, c: uvit_standin(a, n, c, tl=8))(x, x_len, ctx_dummy)
    jax.block_until_ready(x_out_tiled)
    assert jnp.allclose(x_out_tiled, x_out_ref, atol=1e-6), "tiled stand-in mismatch"

    # spk_proj reference (mask is computed in-kernel from ref_len).
    ref_mask = jnp.arange(Lr)[None, :] < ref_len[:, None]
    ref_expected = jnp.where(
        ref_mask[:, :, None],
        jnp.einsum("blc,cd->bld", reference, params["spk_proj_w"])
        + params["spk_proj_b"][0],
        0.0)

    ref_f32 = jax.jit(lambda r, n: spk_proj_masked(
        r, n, params["spk_proj_w"], params["spk_proj_b"], tl=8))(reference, ref_len)
    jax.block_until_ready(ref_f32)
    assert jnp.allclose(ref_f32, ref_expected, atol=1e-4, rtol=1e-4), "spk_proj f32 mismatch"

    # bf16 MXU operands (half the operand DMA bytes) -- looser tolerance.
    ref_bf16 = jax.jit(lambda r, n: spk_proj_masked(
        r, n, params["spk_proj_w"], params["spk_proj_b"],
        mxu_dtype=jnp.bfloat16))(reference, ref_len)
    jax.block_until_ready(ref_bf16)
    assert jnp.allclose(ref_bf16, ref_expected, atol=1e-1, rtol=5e-2), "spk_proj bf16 mismatch"

    print("KERNEL_OK")
</pallas_src>

<mosaic_0001>
module attributes {stable_mosaic.version = 11 : i64} {
  func.func @_spk_proj_kernel(%arg0: i32, %arg1: i32, %arg2: memref<2xi32, #tpu.memory_space<smem>>, %arg3: memref<1x16x128xf32, #tpu.memory_space<vmem>>, %arg4: memref<128x128xf32, #tpu.memory_space<vmem>>, %arg5: memref<1x128xf32, #tpu.memory_space<vmem>>, %arg6: memref<1x16x128xf32, #tpu.memory_space<vmem>>) attributes {dimension_semantics = [#tpu.dimension_semantics<parallel>, #tpu.dimension_semantics<parallel>], iteration_bounds = array<i64: 2, 1>, scalar_prefetch = 1 : i64, scratch_operands = 0 : i64, tpu.core_type = #tpu.core_type<tc>, window_params = [{transform_indices = @transform_0, window_bounds = array<i64: 1, 16, 128>}, {pipeline_mode = #tpu.pipeline_mode<synchronous>, transform_indices = @transform_1, window_bounds = array<i64: 128, 128>}, {pipeline_mode = #tpu.pipeline_mode<synchronous>, transform_indices = @transform_2, window_bounds = array<i64: 1, 128>}, {transform_indices = @transform_3, window_bounds = array<i64: 1, 16, 128>}]} {
    %c0 = arith.constant 0 : index
    %c0_0 = arith.constant 0 : index
    %c0_1 = arith.constant 0 : index
    %0 = vector.load %arg3[%c0, %c0_0, %c0_1] : memref<1x16x128xf32, #tpu.memory_space<vmem>>, vector<1x16x128xf32>
    %1 = vector.shape_cast %0 : vector<1x16x128xf32> to vector<16x128xf32>
    %c0_2 = arith.constant 0 : index
    %c0_3 = arith.constant 0 : index
    %2 = vector.load %arg4[%c0_2, %c0_3] : memref<128x128xf32, #tpu.memory_space<vmem>>, vector<128x128xf32>
    %cst = arith.constant dense<0.000000e+00> : vector<16x128xf32>
    %3 = tpu.matmul %1, %2, %cst {dimension_numbers = #tpu.dot_dimension_numbers<[1], [0], [0], [1], [0, 0, 1, 1], [], []>} : vector<16x128xf32>, vector<128x128xf32>, vector<16x128xf32> -> vector<16x128xf32>
    %c0_4 = arith.constant 0 : index
    %c0_5 = arith.constant 0 : index
    %4 = vector.load %arg5[%c0_4, %c0_5] : memref<1x128xf32, #tpu.memory_space<vmem>>, vector<1x128xf32>
    %5 = vector.broadcast %4 : vector<1x128xf32> to vector<16x128xf32>
    %6 = arith.addf %3, %5 : vector<16x128xf32>
    %c16_i32 = arith.constant 16 : i32
    %7 = arith.muli %arg1, %c16_i32 : i32
    %8 = tpu.iota {dimensions = array<i32: 0>} : vector<16x1xi32>
    %9 = vector.broadcast %7 : i32 to vector<16x1xi32>
    %10 = arith.addi %9, %8 : vector<16x1xi32>
    %11 = arith.index_cast %arg0 : i32 to index
    %12 = memref.load %arg2[%11] : memref<2xi32, #tpu.memory_space<smem>>
    %13 = vector.broadcast %12 : i32 to vector<16x1xi32>
    %14 = arith.cmpi slt, %10, %13 : vector<16x1xi32>
    %cst_6 = arith.constant 0.000000e+00 : f32
    %15 = vector.broadcast %cst_6 : f32 to vector<16x128xf32>
    %16 = vector.shape_cast %14 : vector<16x1xi1> to vector<16x1xi1>
    %17 = vector.broadcast %16 : vector<16x1xi1> to vector<16x128xi1>
    %18 = arith.select %17, %6, %15 : vector<16x128xi1>, vector<16x128xf32>
    %c0_7 = arith.constant 0 : index
    %c0_8 = arith.constant 0 : index
    %c0_9 = arith.constant 0 : index
    %19 = vector.load %arg6[%c0_7, %c0_8, %c0_9] : memref<1x16x128xf32, #tpu.memory_space<vmem>>, vector<1x16x128xf32>
    %20 = vector.shape_cast %19 : vector<1x16x128xf32> to vector<16x128xf32>
    %21 = vector.shape_cast %18 : vector<16x128xf32> to vector<1x16x128xf32>
    tpu.vector_store %arg6[%c0_7, %c0_8, %c0_9], %21 {strides = array<i32>} : memref<1x16x128xf32, #tpu.memory_space<vmem>>, vector<1x16x128xf32>,
    return
  }
  func.func @transform_0(%arg0: i32, %arg1: i32, %arg2: memref<2xi32, #tpu.memory_space<smem>>) -> (i32, i32, i32) {
    %c0_i32 = arith.constant 0 : i32
    %c0_i32_0 = arith.constant 0 : i32
    return %arg0, %arg1, %c0_i32 : i32, i32, i32
  }
  func.func @transform_1(%arg0: i32, %arg1: i32, %arg2: memref<2xi32, #tpu.memory_space<smem>>) -> (i32, i32) {
    %c0_i32 = arith.constant 0 : i32
    %c0_i32_0 = arith.constant 0 : i32
    %c0_i32_1 = arith.constant 0 : i32
    return %c0_i32, %c0_i32_0 : i32, i32
  }
  func.func @transform_2(%arg0: i32, %arg1: i32, %arg2: memref<2xi32, #tpu.memory_space<smem>>) -> (i32, i32) {
    %c0_i32 = arith.constant 0 : i32
    %c0_i32_0 = arith.constant 0 : i32
    %c0_i32_1 = arith.constant 0 : i32
    return %c0_i32, %c0_i32_0 : i32, i32
  }
  func.func @transform_3(%arg0: i32, %arg1: i32, %arg2: memref<2xi32, #tpu.memory_space<smem>>) -> (i32, i32, i32) {
    %c0_i32 = arith.constant 0 : i32
    %c0_i32_0 = arith.constant 0 : i32
    return %arg0, %arg1, %c0_i32 : i32, i32, i32
  }
}

module attributes {stable_mosaic.version = 11 : i64} {
  func.func @kernel(%arg0: i32, %arg1: i32, %arg2: memref<2xi32, #tpu.memory_space<smem>>, %arg3: memref<2x20x128xf32, #tpu.memory_space<any>>, %arg4: memref<2x16x128xf32, #tpu.memory_space<any>>, %arg5: memref<2x20x128xf32, #tpu.memory_space<any>>, %arg6: memref<20x128xf32, #tpu.memory_space<vmem>>, %arg7: memref<!tpu.dma_semaphore, #tpu.memory_space<semaphore_mem>>) attributes {dimension_semantics = [#tpu.dimension_semantics<parallel>, #tpu.dimension_semantics<parallel>], iteration_bounds = array<i64: 2, 1>, scalar_prefetch = 1 : i64, scratch_operands = 2 : i64, tpu.core_type = #tpu.core_type<tc>, window_params = [{}, {}, {}]} {
    %c20_i32 = arith.constant 20 : i32
    %0 = arith.muli %arg1, %c20_i32 : i32
    %1 = arith.index_cast %arg0 : i32 to index
    %2 = memref.load %arg2[%1] : memref<2xi32, #tpu.memory_space<smem>>
    %3 = arith.cmpi sge, %0, %2 : i32
    %4 = arith.extui %3 : i1 to i32
    %c0_i32 = arith.constant 0 : i32
    %5 = arith.cmpi ne, %4, %c0_i32 : i32
    scf.if %5 {
      %cst = arith.constant 0.000000e+00 : f32
      %12 = vector.broadcast %cst : f32 to vector<20x128xf32>
      %c0 = arith.constant 0 : index
      %c0_2 = arith.constant 0 : index
      %13 = vector.load %arg6[%c0, %c0_2] : memref<20x128xf32, #tpu.memory_space<vmem>>, vector<20x128xf32>
      tpu.vector_store %arg6[%c0, %c0_2], %12 {strides = array<i32>} : memref<20x128xf32, #tpu.memory_space<vmem>>, vector<20x128xf32>,
      %c0_i32_3 = arith.constant 0 : i32
      %c0_i32_4 = arith.constant 0 : i32
      %14 = tpu.memref_slice %arg6[%c0_i32_3, %c0_i32_4] : memref<20x128xf32, #tpu.memory_space<vmem>> -> memref<20x128xf32, #tpu.memory_space<vmem>>
      %c0_i32_5 = arith.constant 0 : i32
      %15 = tpu.memref_slice %arg5[%arg0, %0, %c0_i32_5] : memref<2x20x128xf32, #tpu.memory_space<any>> -> memref<1x20x128xf32, #tpu.memory_space<any>>
      %16 = tpu.memref_squeeze %15 : memref<1x20x128xf32, #tpu.memory_space<any>> -> memref<20x128xf32, #tpu.memory_space<any>>
      tpu.enqueue_dma source(%14 : memref<20x128xf32, #tpu.memory_space<vmem>>) target(%16 : memref<20x128xf32, #tpu.memory_space<any>>) target_semaphore(%arg7 : memref<!tpu.dma_semaphore, #tpu.memory_space<semaphore_mem>>)
      %c0_i32_6 = arith.constant 0 : i32
      %c0_i32_7 = arith.constant 0 : i32
      %17 = tpu.memref_slice %arg6[%c0_i32_6, %c0_i32_7] : memref<20x128xf32, #tpu.memory_space<vmem>> -> memref<20x128xf32, #tpu.memory_space<vmem>>
      %c0_i32_8 = arith.constant 0 : i32
      %18 = tpu.memref_slice %arg5[%arg0, %0, %c0_i32_8] : memref<2x20x128xf32, #tpu.memory_space<any>> -> memref<1x20x128xf32, #tpu.memory_space<any>>
      %19 = tpu.memref_squeeze %18 : memref<1x20x128xf32, #tpu.memory_space<any>> -> memref<20x128xf32, #tpu.memory_space<any>>
      tpu.wait_dma2 semaphore(%arg7 : memref<!tpu.dma_semaphore, #tpu.memory_space<semaphore_mem>>) src(%17 : memref<20x128xf32, #tpu.memory_space<vmem>>) dst(%19 : memref<20x128xf32, #tpu.memory_space<any>>)
    } else {
    }
    %6 = arith.cmpi slt, %0, %2 : i32
    %c20_i32_0 = arith.constant 20 : i32
    %7 = arith.addi %0, %c20_i32_0 : i32
    %8 = arith.cmpi sgt, %7, %2 : i32
    %9 = arith.andi %6, %8 : i1
    %10 = arith.extui %9 : i1 to i32
    %c0_i32_1 = arith.constant 0 : i32
    %11 = arith.cmpi ne, %10, %c0_i32_1 : i32
    scf.if %11 {
      %c0_i32_2 = arith.constant 0 : i32
      %12 = tpu.memref_slice %arg3[%arg0, %0, %c0_i32_2] : memref<2x20x128xf32, #tpu.memory_space<any>> -> memref<1x20x128xf32, #tpu.memory_space<any>>
      %13 = tpu.memref_squeeze %12 : memref<1x20x128xf32, #tpu.memory_space<any>> -> memref<20x128xf32, #tpu.memory_space<any>>
      %c0_i32_3 = arith.constant 0 : i32
      %c0_i32_4 = arith.constant 0 : i32
      %14 = tpu.memref_slice %arg6[%c0_i32_3, %c0_i32_4] : memref<20x128xf32, #tpu.memory_space<vmem>> -> memref<20x128xf32, #tpu.memory_space<vmem>>
      tpu.enqueue_dma source(%13 : memref<20x128xf32, #tpu.memory_space<any>>) target(%14 : memref<20x128xf32, #tpu.memory_space<vmem>>) target_semaphore(%arg7 : memref<!tpu.dma_semaphore, #tpu.memory_space<semaphore_mem>>)
      %c0_i32_5 = arith.constant 0 : i32
      %15 = tpu.memref_slice %arg3[%arg0, %0, %c0_i32_5] : memref<2x20x128xf32, #tpu.memory_space<any>> -> memref<1x20x128xf32, #tpu.memory_space<any>>
      %16 = tpu.memref_squeeze %15 : memref<1x20x128xf32, #tpu.memory_space<any>> -> memref<20x128xf32, #tpu.memory_space<any>>
      %c0_i32_6 = arith.constant 0 : i32
      %c0_i32_7 = arith.constant 0 : i32
      %17 = tpu.memref_slice %arg6[%c0_i32_6, %c0_i32_7] : memref<20x128xf32, #tpu.memory_space<vmem>> -> memref<20x128xf32, #tpu.memory_space<vmem>>
      tpu.wait_dma2 semaphore(%arg7 : memref<!tpu.dma_semaphore, #tpu.memory_space<semaphore_mem>>) src(%16 : memref<20x128xf32, #tpu.memory_space<any>>) dst(%17 : memref<20x128xf32, #tpu.memory_space<vmem>>)
      %18 = tpu.iota {dimensions = array<i32: 0>} : vector<20x1xi32>
      %19 = vector.broadcast %0 : i32 to vector<20x1xi32>
      %20 = arith.addi %19, %18 : vector<20x1xi32>
      %c0 = arith.constant 0 : index
      %c0_8 = arith.constant 0 : index
      %21 = vector.load %arg6[%c0, %c0_8] : memref<20x128xf32, #tpu.memory_space<vmem>>, vector<20x128xf32>
      %22 = vector.broadcast %2 : i32 to vector<20x1xi32>
      %23 = arith.cmpi slt, %20, %22 : vector<20x1xi32>
      %cst = arith.constant 0.000000e+00 : f32
      %24 = vector.broadcast %cst : f32 to vector<20x128xf32>
      %25 = vector.shape_cast %23 : vector<20x1xi1> to vector<20x1xi1>
      %26 = vector.broadcast %25 : vector<20x1xi1> to vector<20x128xi1>
      %27 = arith.select %26, %21, %24 : vector<20x128xi1>, vector<20x128xf32>
      %c0_9 = arith.constant 0 : index
      %c0_10 = arith.constant 0 : index
      %28 = vector.load %arg6[%c0_9, %c0_10] : memref<20x128xf32, #tpu.memory_space<vmem>>, vector<20x128xf32>
      tpu.vector_store %arg6[%c0_9, %c0_10], %27 {strides = array<i32>} : memref<20x128xf32, #tpu.memory_space<vmem>>, vector<20x128xf32>,
      %c0_i32_11 = arith.constant 0 : i32
      %c0_i32_12 = arith.constant 0 : i32
      %29 = tpu.memref_slice %arg6[%c0_i32_11, %c0_i32_12] : memref<20x128xf32, #tpu.memory_space<vmem>> -> memref<20x128xf32, #tpu.memory_space<vmem>>
      %c0_i32_13 = arith.constant 0 : i32
      %30 = tpu.memref_slice %arg5[%arg0, %0, %c0_i32_13] : memref<2x20x128xf32, #tpu.memory_space<any>> -> memref<1x20x128xf32, #tpu.memory_space<any>>
      %31 = tpu.memref_squeeze %30 : memref<1x20x128xf32, #tpu.memory_space<any>> -> memref<20x128xf32, #tpu.memory_space<any>>
      tpu.enqueue_dma source(%29 : memref<20x128xf32, #tpu.memory_space<vmem>>) target(%31 : memref<20x128xf32, #tpu.memory_space<any>>) target_semaphore(%arg7 : memref<!tpu.dma_semaphore, #tpu.memory_space<semaphore_mem>>)
      %c0_i32_14 = arith.constant 0 : i32
      %c0_i32_15 = arith.constant 0 : i32
      %32 = tpu.memref_slice %arg6[%c0_i32_14, %c0_i32_15] : memref<20x128xf32, #tpu.memory_space<vmem>> -> memref<20x128xf32, #tpu.memory_space<vmem>>
      %c0_i32_16 = arith.constant 0 : i32
      %33 = tpu.memref_slice %arg5[%arg0, %0, %c0_i32_16] : memref<2x20x128xf32, #tpu.memory_space<any>> -> memref<1x20x128xf32, #tpu.memory_space<any>>
      %34 = tpu.memref_squeeze %33 : memref<1x20x128xf32, #tpu.memory_space<any>> -> memref<20x128xf32, #tpu.memory_space<any>>
      tpu.wait_dma2 semaphore(%arg7 : memref<!tpu.dma_semaphore, #tpu.memory_space<semaphore_mem>>) src(%32 : memref<20x128xf32, #tpu.memory_space<vmem>>) dst(%34 : memref<20x128xf32, #tpu.memory_space<any>>)
    } else {
    }
    return
  }
}

</mosaic_0001>

<llo_original>
// kernel: solospeech_disc_forward.2
$region0: #{solospeech_disc_forward.2}
  #allocation0 [shape = 'u32[]', space=smem, size = 0x4, offset = 0x4, fixed_abs, tag = 'smem constant byte address 0x4 - core index']
  #allocation1 [shape = 'u32[144,128]{1,0:T(1,128)}', space=vmem, size = 0x12000, scoped, tag = 'internal scratch']
  #allocation2 [shape = 's32[1]{0}', space=sflag, size = 0x4, scoped, tag = 'scoped memory for solospeech_disc_forward.2']
  #allocation3 [shape = 'u8[512]{0}', space=smem, size = 0x200, scoped, tag = 'prefetched SMEM operand 0']
  %s0 = inlined_call_operand.vmem [shape: s32[2], index: 0, kind: input, shape index: {}]
  %s1 = inlined_call_operand.vmem [shape: f32[2,16,128], index: 1, kind: input, shape index: {}]
  %s2 = inlined_call_operand.hbm [shape: f32[128,128], index: 2, kind: input, shape index: {}]
  %s3 = inlined_call_operand.vmem [shape: f32[1,128], index: 3, kind: input, shape index: {}]
  %s4 = inlined_call_operand.vmem [shape: f32[2,16,128], index: 4, kind: output, shape index: {}]
  %s5 = sld [smem:[#allocation0]]
  $region49: #{solospeech_disc_forward.2} parent=0
    _
  %s7 = ssub.s32 1, %s5
  %s8 = scalar_select 0, %s7, %s5
  %s9 = sshll.u32 %s0, 4
  %s10 = int_to_ptr.vmem [resolvable:$true] %s9
  %12 = dma.vmem_to_smem %s10, 16, [#allocation3], [#allocation2]
  %13 = dma.done [#allocation2], 16
  %14 = sfence
  $region1: #{solospeech_disc_forward.2} parent=0
    #allocation4 [shape = 'u8[65536]{0}', space=vmem, size = 0x10000, scoped, tag = 'input window, operand 2, single buffered']
    #allocation5 [shape = 's32[2]{0}', space=sflag, size = 0x8, scoped, tag = 'scoped memory for solospeech_disc_forward.2']
    %15 = vsyncpa [#allocation5], 0
    loop: start=0, step=1, limit=4
    $region2: #{solospeech_disc_forward.2} parent=1 // loop_pre_header
      _
    $region3: #{solospeech_disc_forward.2} parent=1 // loop_header
      %s17 = sphi 0, %s21
      %p18 = scmp.ge.s32.totalorder %s17, 4
      %s24 = sphi 0, %s36
      %s25 = sphi 0, %s32
      %s26 = sphi 0, %s24
      %s27 = sphi 0, %s25
      %s28 = sphi 0, %s26
      %s29 = sphi 0, %s27
      %s41 = sphi 0, %s43
      %s44 = sphi 0, %s41
      %s45 = sphi 0, %s44
      %s61 = sphi 0, %s45
      %s65 = sphi 0, %s65
      %s67 = sphi 0, %s65
      %s68 = sphi 0, %s67
      %s82 = sphi 0, %s68
      %s86 = sphi 0, %s86
      %s88 = sphi 0, %s86
      %s89 = sphi 0, %s88
      %s103 = sphi 0, %s89
      %s111 = sphi 0, %s113
      %s114 = sphi 0, %s111
      %s115 = sphi 0, %s114
      %s131 = sphi 0, %s115
    $region4: #{solospeech_disc_forward.2} parent=1 // loop_header_branch
      %20 = sbr.rel (%p18) target = $region8
    $region5: #{solospeech_disc_forward.2} parent=1 // loop_body
      %s22 = ssub.s32 %s17, 1
      %s23 = ssub.s32 %s17, 2
      %s30 = sadd.s32 1, %s25
      %p31 = scmp.ge.s32.totalorder %s30, 1
      %s32 = scalar_select %p31, 0, %s30
      %s33 = sadd.s32 1, %s24
      %s34 = scalar_select %p31, %s33, %s24
      %p35 = scmp.ge.s32.totalorder %s34, 2
      %s36 = scalar_select %p35, 0, %s34
      %s37 = ssub.s32 %s24, %s36
      %s38 = ssub.s32 %s25, %s32
      %s39 = sor.u32 %s37, %s38
      %p40 = scmp.eq.s32.totalorder %s39, 0
      %s42 = sadd.s32 %s41, 1
      %s43 = scalar_select %p40, %s41, %s42
      %p46 = pneg %p40
      %p47 = scmp.eq.s32.totalorder %s17, 1
      %p48 = por %p46, %p47
      %p49 = scmp.ne.s32.totalorder %s41, %s44
      %p50 = scmp.eq.s32.totalorder %s17, 0
      %p51 = por %p49, %p50
      %p52 = scmp.ne.s32.totalorder %s41, %s44
      %p53 = scmp.eq.s32.totalorder %s22, 1
      %p54 = por %p52, %p53
      %p55 = scmp.ne.s32.totalorder %s44, %s45
      %p56 = scmp.eq.s32.totalorder %s22, 0
      %p57 = por %p55, %p56
      %p58 = scmp.ne.s32.totalorder %s44, %s45
      %p59 = scmp.eq.s32.totalorder %s23, 1
      %p60 = por %p58, %p59
      %p62 = scmp.ne.s32.totalorder %s45, %s61
      %p63 = scmp.eq.s32.totalorder %s23, 0
      %p64 = por %p62, %p63
      %s66 = sadd.s32 %s65, 1
      %p69 = scmp.eq.s32.totalorder %s17, 1
      %p70 = scmp.ne.s32.totalorder %s65, %s67
      %p71 = scmp.eq.s32.totalorder %s17, 0
      %p72 = por %p70, %p71
      %p73 = scmp.ne.s32.totalorder %s65, %s67
      %p74 = scmp.eq.s32.totalorder %s22, 1
      %p75 = por %p73, %p74
      %p76 = scmp.ne.s32.totalorder %s67, %s68
      %p77 = scmp.eq.s32.totalorder %s22, 0
      %p78 = por %p76, %p77
      %p79 = scmp.ne.s32.totalorder %s67, %s68
      %p80 = scmp.eq.s32.totalorder %s23, 1
      %p81 = por %p79, %p80
      %p83 = scmp.ne.s32.totalorder %s68, %s82
      %p84 = scmp.eq.s32.totalorder %s23, 0
      %p85 = por %p83, %p84
      %s87 = sadd.s32 %s86, 1
      %p90 = scmp.eq.s32.totalorder %s17, 1
      %p91 = scmp.ne.s32.totalorder %s86, %s88
      %p92 = scmp.eq.s32.totalorder %s17, 0
      %p93 = por %p91, %p92
      %p94 = scmp.ne.s32.totalorder %s86, %s88
      %p95 = scmp.eq.s32.totalorder %s22, 1
      %p96 = por %p94, %p95
      %p97 = scmp.ne.s32.totalorder %s88, %s89
      %p98 = scmp.eq.s32.totalorder %s22, 0
      %p99 = por %p97, %p98
      %p100 = scmp.ne.s32.totalorder %s88, %s89
      %p101 = scmp.eq.s32.totalorder %s23, 1
      %p102 = por %p100, %p101
      %p104 = scmp.ne.s32.totalorder %s89, %s103
      %p105 = scmp.eq.s32.totalorder %s23, 0
      %p106 = por %p104, %p105
      %s107 = ssub.s32 %s24, %s36
      %s108 = ssub.s32 %s25, %s32
      %s109 = sor.u32 %s107, %s108
      %p110 = scmp.eq.s32.totalorder %s109, 0
      %s112 = sadd.s32 %s111, 1
      %s113 = scalar_select %p110, %s111, %s112
      %p116 = pneg %p110
      %p117 = scmp.eq.s32.totalorder %s17, 1
      %p118 = por %p116, %p117
      %p119 = scmp.ne.s32.totalorder %s111, %s114
      %p120 = scmp.eq.s32.totalorder %s17, 0
      %p121 = por %p119, %p120
      %p122 = scmp.ne.s32.totalorder %s111, %s114
      %p123 = scmp.eq.s32.totalorder %s22, 1
      %p124 = por %p122, %p123
      %p125 = scmp.ne.s32.totalorder %s114, %s115
      %p126 = scmp.eq.s32.totalorder %s22, 0
      %p127 = por %p125, %p126
      %p128 = scmp.ne.s32.totalorder %s114, %s115
      %p129 = scmp.eq.s32.totalorder %s23, 1
      %p130 = por %p128, %p129
      %p132 = scmp.ne.s32.totalorder %s115, %s131
      %p133 = scmp.eq.s32.totalorder %s23, 0
      %p134 = por %p132, %p133
      %p135 = scmp.le.s32.totalorder 1, %s17
      %p136 = scmp.lt.s32.totalorder %s17, 3
      %p137 = pnand %p135, %p136
      %p138 = pneg %p137
      // Predicated region
      $region9: #{solospeech_disc_forward.2} parent=5 // pred_check
        _
      $region10: #{solospeech_disc_forward.2} parent=5 // pred_check_branch
        %140 = sbr.rel (%p137) target = $region12
      $region11: #{solospeech_disc_forward.2} parent=5 // pred_region
        %s141 = ssub.s32 %s17, 1
        // Predicated region
        $region13: #{solospeech_disc_forward.2} parent=11 // pred_check
          %p142 = pneg %p78
        $region14: #{solospeech_disc_forward.2} parent=11 // pred_check_branch
          %144 = sbr.rel (%p142) target = $region16
        $region15: #{solospeech_disc_forward.2} parent=11 // pred_region
          %s146 = ssub.s32 2048, 2048
          %147 = vsyncadd [#allocation5], %s146
          %s148 = sshll.u32 [#allocation4], 4
          %s149 = int_to_ptr.vmem [resolvable:$true] %s148
          %154 = dma.hbm_to_vmem [thread:$0]  %s2, 2048, %s149, [#allocation5], 128, 128, 8
        $region16: #{solospeech_disc_forward.2} parent=11 // pred_fallthru
          _
        // Predicated region
        $region17: #{solospeech_disc_forward.2} parent=11 // pred_check
          %p155 = pneg %p99
        $region18: #{solospeech_disc_forward.2} parent=11 // pred_check_branch
          %157 = sbr.rel (%p155) target = $region20
        $region19: #{solospeech_disc_forward.2} parent=11 // pred_region
          _
        $region20: #{solospeech_disc_forward.2} parent=11 // pred_fallthru
          _
      $region12: #{solospeech_disc_forward.2} parent=5 // pred_fallthru
        _
      %p158 = scmp.lt.s32.totalorder %s17, 2
      // Predicated region
      $region21: #{solospeech_disc_forward.2} parent=5 // pred_check
        %p159 = pneg %p158
      $region22: #{solospeech_disc_forward.2} parent=5 // pred_check_branch
        %161 = sbr.rel (%p159) target = $region24
      $region23: #{solospeech_disc_forward.2} parent=5 // pred_region
        // Predicated region
        $region25: #{solospeech_disc_forward.2} parent=23 // pred_check
          %p162 = pneg %p51
        $region26: #{solospeech_disc_forward.2} parent=23 // pred_check_branch
          %164 = sbr.rel (%p162) target = $region28
        $region27: #{solospeech_disc_forward.2} parent=23 // pred_region
          %s165 = smul.u32 2, %s25
          %p166 = scmp.lt.s32.totalorder %s24, 1
          %s167 = scalar_select %p166, %s24, 1
          %p168 = scmp.lt.s32.totalorder %s165, 1
          %s169 = scalar_select %p168, %s165, 1
          %s170 = smul.addr %s167, 2
          %s171 = sadd.s32 %s169, %s170
          %s172 = smul.addr %s171, 8
          %s173 = scalar_lea.vmem %s1, %s172
          %s174 = smul.u32 2, %s25
        $region28: #{solospeech_disc_forward.2} parent=23 // pred_fallthru
          _
      $region24: #{solospeech_disc_forward.2} parent=5 // pred_fallthru
        _
      %p175 = scmp.le.s32.totalorder 1, %s17
      %p176 = scmp.lt.s32.totalorder %s17, 3
      %p177 = pnand %p175, %p176
      %p178 = pneg %p177
      // Predicated region
      $region29: #{solospeech_disc_forward.2} parent=5 // pred_check
        _
      $region30: #{solospeech_disc_forward.2} parent=5 // pred_check_branch
        %180 = sbr.rel (%p177) target = $region32
      $region31: #{solospeech_disc_forward.2} parent=5 // pred_region
        %s181 = ssub.s32 %s17, 1
        // Predicated region
        $region33: #{solospeech_disc_forward.2} parent=31 // pred_check
          %p182 = pneg %p78
        $region34: #{solospeech_disc_forward.2} parent=31 // pred_check_branch
          %184 = sbr.rel (%p182) target = $region36
        $region35: #{solospeech_disc_forward.2} parent=31 // pred_region
          %185 = dma.done [#allocation5], 2048
        $region36: #{solospeech_disc_forward.2} parent=31 // pred_fallthru
          _
        %s186 = smul.u32 2, %s27
        %p187 = scmp.lt.s32.totalorder %s26, 1
        %s188 = scalar_select %p187, %s26, 1
        %p189 = scmp.lt.s32.totalorder %s186, 1
        %s190 = scalar_select %p189, %s186, 1
        %s191 = smul.addr %s188, 2
        %s192 = sadd.s32 %s190, %s191
        %s193 = smul.addr %s192, 8
        %s194 = scalar_lea.vmem %s1, %s193
        %p195 = pneg %p57
        %p196 = pneg %p54
        %p197 = pneg %p78
        %p198 = pneg %p75
        %p199 = pneg %p99
        %p200 = pneg %p96
        %p201 = pneg %p127
        %p202 = pneg %p124
        %s203 = smul.u32 2, %s27
        %p204 = scmp.lt.s32.totalorder %s26, 1
        %s205 = scalar_select %p204, %s26, 1
        %p206 = scmp.lt.s32.totalorder %s203, 1
        %s207 = scalar_select %p206, %s203, 1
        %s208 = smul.addr %s205, 2
        %s209 = sadd.s32 %s207, %s208
        %s210 = smul.addr %s209, 8
        %s211 = scalar_lea.vmem %s4, %s210
        %s212 = smul.u32 2, %s27
        %p213 = scmp.lt.s32.totalorder %s26, 1
        %s214 = scalar_select %p213, %s26, 1
        %p215 = scmp.lt.s32.totalorder %s212, 1
        %s216 = scalar_select %p215, %s212, 1
        %s217 = smul.addr %s214, 2
        %s218 = sadd.s32 %s216, %s217
        %s219 = smul.addr %s218, 8
        %s220 = scalar_lea.vmem %s1, %s219
        %s221 = smul.u32 2, %s27
        %s222 = smul.u32 2, %s27
        %p223 = scmp.lt.s32.totalorder %s26, 1
        %s224 = scalar_select %p223, %s26, 1
        %p225 = scmp.lt.s32.totalorder %s222, 1
        %s226 = scalar_select %p225, %s222, 1
        %s227 = smul.addr %s224, 2
        %s228 = sadd.s32 %s226, %s227
        %s229 = smul.addr %s228, 8
        %s230 = scalar_lea.vmem %s4, %s229
        %s231 = smul.u32 2, %s27
        %v232 = vld [vmem:[%s220] sm:$0xff]
        %v233 = vld [vmem:[%s220 + $0x8] sm:$0xff]
        %v234 = vld [vmem:[#allocation4] sm:$0xff]
        %v235 = vld [vmem:[#allocation4 + $0x8] sm:$0xff]
        %v236 = vld [vmem:[#allocation4 + $0x10] sm:$0xff]
        %v237 = vld [vmem:[#allocation4 + $0x18] sm:$0xff]
        %v238 = vld [vmem:[#allocation4 + $0x20] sm:$0xff]
        %v239 = vld [vmem:[#allocation4 + $0x28] sm:$0xff]
        %v240 = vld [vmem:[#allocation4 + $0x30] sm:$0xff]
        %v241 = vld [vmem:[#allocation4 + $0x38] sm:$0xff]
        %v242 = vld [vmem:[#allocation4 + $0x40] sm:$0xff]
        %v243 = vld [vmem:[#allocation4 + $0x48] sm:$0xff]
        %v244 = vld [vmem:[#allocation4 + $0x50] sm:$0xff]
        %v245 = vld [vmem:[#allocation4 + $0x58] sm:$0xff]
        %v246 = vld [vmem:[#allocation4 + $0x60] sm:$0xff]
        %v247 = vld [vmem:[#allocation4 + $0x68] sm:$0xff]
        %v248 = vld [vmem:[#allocation4 + $0x70] sm:$0xff]
        %v249 = vld [vmem:[#allocation4 + $0x78] sm:$0xff]
        %v250 = vld [vmem:[%s3] sm:$0x1]
        %v252 = vlaneseq
        %v253 = vshrl.u32 %v252, 7
        %v254 = vsub.s32 0, %v253
        %v255 = vrot.slane %v250, %v254
        %257 = vmatprep.subr.mxu0 0.0
        %258 = vmatpush1.msra.mxu0 %v234
        %259 = vmatprep.subr.mxu0 0.0
        %260 = vmatpush1.msra.mxu0 %v235
        %261 = vmatprep.subr.mxu0 0.0
        %262 = vmatpush1.msra.mxu0 %v236
        %263 = vmatprep.subr.mxu0 0.0
        %264 = vmatpush1.msra.mxu0 %v237
        %265 = vmatprep.subr.mxu0 0.0
        %266 = vmatpush1.msra.mxu0 %v238
        %267 = vmatprep.subr.mxu0 0.0
        %268 = vmatpush1.msra.mxu0 %v239
        %269 = vmatprep.subr.mxu0 0.0
        %270 = vmatpush1.msra.mxu0 %v240
        %271 = vmatprep.subr.mxu0 0.0
        %272 = vmatpush1.msra.mxu0 %v241
        %273 = vmatprep.subr.mxu0 0.0
        %274 = vmatpush1.msra.mxu0 %v242
        %275 = vmatprep.subr.mxu0 0.0
        %276 = vmatpush1.msra.mxu0 %v243
        %277 = vmatprep.subr.mxu0 0.0
        %278 = vmatpush1.msra.mxu0 %v244
        %279 = vmatprep.subr.mxu0 0.0
        %280 = vmatpush1.msra.mxu0 %v245
        %281 = vmatprep.subr.mxu0 0.0
        %282 = vmatpush1.msra.mxu0 %v246
        %283 = vmatprep.subr.mxu0 0.0
        %284 = vmatpush1.msra.mxu0 %v247
        %285 = vmatprep.subr.mxu0 0.0
        %286 = vmatpush1.msra.mxu0 %v248
        %287 = vmatprep.subr.mxu0 0.0
        %288 = vmatpush1.msra.mxu0 %v249
        %289 = vmatprep.subr.mxu0 0.0
        %290 = vmatpush1.msra.mxu0 0.0
        %291 = vmatprep.subr.mxu0 0.0
        %292 = vmatpush1.msra.mxu0 0.0
        %293 = vmatprep.subr.mxu0 0.0
        %294 = vmatpush1.msra.mxu0 0.0
        %295 = vmatprep.subr.mxu0 0.0
        %296 = vmatpush1.msra.mxu0 0.0
        %297 = vmatprep.subr.mxu0 0.0
        %298 = vmatpush1.msra.mxu0 0.0
        %299 = vmatprep.subr.mxu0 0.0
        %300 = vmatpush1.msra.mxu0 0.0
        %301 = vmatprep.subr.mxu0 0.0
        %302 = vmatpush1.msra.mxu0 0.0
        %303 = vmatprep.subr.mxu0 0.0
        %304 = vmatpush1.msra.mxu0 0.0
        %305 = vmatprep.subr.mxu0 0.0
        %306 = vmatpush1.msra.mxu0 0.0
        %307 = vmatprep.subr.mxu0 0.0
        %308 = vmatpush1.msra.mxu0 0.0
        %309 = vmatprep.subr.mxu0 0.0
        %310 = vmatpush1.msra.mxu0 0.0
        %311 = vmatprep.subr.mxu0 0.0
        %312 = vmatpush1.msra.mxu0 0.0
        %313 = vmatprep.subr.mxu0 0.0
        %314 = vmatpush1.msra.mxu0 0.0
        %315 = vmatprep.subr.mxu0 0.0
        %316 = vmatpush1.msra.mxu0 0.0
        %317 = vmatprep.subr.mxu0 0.0
        %318 = vmatpush1.msra.mxu0 0.0
        %319 = vmatprep.subr.mxu0 0.0
        %320 = vmatpush1.msra.mxu0 0.0
        %321 = vmatprep.mubr.f32.mxu0 0.0
        %322 = vmatmul.mubr.f32.gmra.mrb[0].mxu0 %v232
        %v323 = vpop.f32.mrb[0].mxu0
        %v324 = vadd.f32 %v255, %v323
        %v325 = vpop.f32.mrb[0].mxu0
        %326 = vmatprep.mubr.f32.mxu0 0.0
        %327 = vmatmul.mubr.f32.gmra.mrb[0].mxu0 %v233
        %v328 = vpop.f32.mrb[0].mxu0
        %v329 = vadd.f32 %v255, %v328
        %v330 = vpop.f32.mrb[0].mxu0
        %331 = vdwg.mxu0
        %s332 = smul.u32 %s27, 16
        %v333 = vlaneseq
        %v334 = vshrl.u32 %v333, 7
        %v335 = vadd.s32 %v334, 8
        %v336 = vstv %s332
        %v337 = vadd.s32 %v336, %v334
        %v338 = vadd.s32 %v336, %v335
        %s339 = sld [smem:[#allocation3 + %s26]]
        %v340 = vstv %s339
        %vm341 = vcmp.lt.s32.totalorder %v337, %v340
        %vm342 = vcmp.lt.s32.totalorder %v338, %v340
        %v343 = vsel %vm341, 1, 0
        %v344 = vsel %vm342, 1, 0
        %vm345 = vcmp.eq.s32.totalorder %v343, 1
        %vm346 = vcmp.eq.s32.totalorder %v344, 1
        %v347 = vsel %vm345, %v324, 0.0
        %v348 = vsel %vm346, %v329, 0.0
        %349 = vst [vmem:[%s230] sm:$0xff] %v347
        %350 = vst [vmem:[%s230 + $0x8] sm:$0xff] %v348
        %s351 = smul.u32 2, %s27
        %p352 = scmp.lt.s32.totalorder %s26, 1
        %s353 = scalar_select %p352, %s26, 1
        %p354 = scmp.lt.s32.totalorder %s351, 1
        %s355 = scalar_select %p354, %s351, 1
        %s356 = smul.addr %s353, 2
        %s357 = sadd.s32 %s355, %s356
        %s358 = smul.addr %s357, 8
        %s359 = scalar_lea.vmem %s4, %s358
        // Predicated region
        $region37: #{solospeech_disc_forward.2} parent=31 // pred_check
          %p360 = pneg %p124
        $region38: #{solospeech_disc_forward.2} parent=31 // pred_check_branch
          %362 = sbr.rel (%p360) target = $region40
        $region39: #{solospeech_disc_forward.2} parent=31 // pred_region
          %s363 = smul.u32 2, %s27
        $region40: #{solospeech_disc_forward.2} parent=31 // pred_fallthru
          _
      $region32: #{solospeech_disc_forward.2} parent=5 // pred_fallthru
        _
      %p364 = scmp.le.s32.totalorder 2, %s17
      // Predicated region
      $region41: #{solospeech_disc_forward.2} parent=5 // pred_check
        %p365 = pneg %p364
      $region42: #{solospeech_disc_forward.2} parent=5 // pred_check_branch
        %367 = sbr.rel (%p365) target = $region44
      $region43: #{solospeech_disc_forward.2} parent=5 // pred_region
        %s368 = ssub.s32 %s17, 2
        // Predicated region
        $region45: #{solospeech_disc_forward.2} parent=43 // pred_check
          %p369 = pneg %p130
        $region46: #{solospeech_disc_forward.2} parent=43 // pred_check_branch
          %371 = sbr.rel (%p369) target = $region48
        $region47: #{solospeech_disc_forward.2} parent=43 // pred_region
          %s372 = smul.u32 2, %s29
          %p373 = scmp.lt.s32.totalorder %s28, 1
          %s374 = scalar_select %p373, %s28, 1
          %p375 = scmp.lt.s32.totalorder %s372, 1
          %s376 = scalar_select %p375, %s372, 1
          %s377 = smul.addr %s374, 2
          %s378 = sadd.s32 %s376, %s377
          %s379 = smul.addr %s378, 8
          %s380 = scalar_lea.vmem %s4, %s379
        $region48: #{solospeech_disc_forward.2} parent=43 // pred_fallthru
          _
      $region44: #{solospeech_disc_forward.2} parent=5 // pred_fallthru
        _
    $region6: #{solospeech_disc_forward.2} parent=1 // loop_footer
      %s21 = sadd.s32 1, %s17
    $region7: #{solospeech_disc_forward.2} parent=1 // loop_footer_branch
      %16 = sbr.rel target = $region3
    $region8: #{solospeech_disc_forward.2} parent=1 // loop_exit
      _
    %381 = vsyncpa [#allocation5], 1
    %s382 = scalar_lea.sflag [#allocation5], 1
    %383 = vsyncpa %s382, 1

// kernel: solospeech_disc_forward.3
$region0: #{solospeech_disc_forward.3}
  #allocation0 [shape = 'u32[]', space=smem, size = 0x4, offset = 0x4, fixed_abs, tag = 'smem constant byte address 0x4 - core index']
  #allocation1 [shape = 'u32[144,128]{1,0:T(1,128)}', space=vmem, size = 0x12000, scoped, tag = 'internal scratch']
  #allocation2 [shape = 'f32[20,128]{1,0:T(8,128)}', space=vmem, size = 0x3000, scoped, tag = 'scratch operand']
  #allocation3 [shape = 's32[1]{0}', space=sflag, size = 0x4, scoped, tag = 'scratch operand']
  #allocation4 [shape = 's32[1]{0}', space=sflag, size = 0x4, scoped, tag = 'scoped memory for solospeech_disc_forward.3']
  #allocation5 [shape = 'u8[512]{0}', space=smem, size = 0x200, scoped, tag = 'prefetched SMEM operand 0']
  #allocation6 [shape = 's32[]', space=sflag, size = 0x4, offset = 0, fixed_abs, tag = 'sflag constant byte address 0x0 - dummy sync flag']
  #allocation7 [shape = 's32[]', space=sflag, size = 0x4, offset = 0, fixed_abs, tag = 'sflag constant byte address 0x0 - dummy sync flag']
  #allocation8 [shape = 's32[]', space=sflag, size = 0x4, offset = 0, fixed_abs, tag = 'sflag constant byte address 0x0 - dummy sync flag']
  %s0 = inlined_call_operand.vmem [shape: s32[2], index: 0, kind: input, shape index: {}]
  %s1 = inlined_call_operand.vmem [shape: f32[2,20,128], index: 1, kind: input, shape index: {}, may-alias: {1,3}]
  %s2 = inlined_call_operand.vmem [shape: f32[2,16,128], index: 2, kind: input, shape index: {}]
  %s3 = inlined_call_operand.vmem [shape: f32[2,20,128], index: 3, kind: output, shape index: {}, may-alias: {1,3}]
  %s4 = sld [smem:[#allocation0]]
  $region128: #{solospeech_disc_forward.3} parent=0
    _
  %s6 = ssub.s32 1, %s4
  %s7 = scalar_select 0, %s6, %s4
  %s8 = sshll.u32 %s0, 4
  %s9 = int_to_ptr.vmem [resolvable:$true] %s8
  %11 = dma.vmem_to_smem %s9, 16, [#allocation5], [#allocation4]
  %12 = dma.done [#allocation4], 16
  %13 = sfence
  loop: start=0, step=1, limit=2
  $region2: #{solospeech_disc_forward.3} parent=0 // loop_pre_header
    _
  $region3: #{solospeech_disc_forward.3} parent=0 // loop_header
    %s15 = sphi 0, %s19
    %p16 = scmp.ge.s32.totalorder %s15, 2
    %s20 = sphi 0, %s28
    %s21 = sphi 0, %s24
  $region4: #{solospeech_disc_forward.3} parent=0 // loop_header_branch
    %18 = sbr.rel (%p16) target = $region8
  $region5: #{solospeech_disc_forward.3} parent=0 // loop_body
    %s22 = sadd.s32 1, %s21
    %p23 = scmp.ge.s32.totalorder %s22, 1
    %s24 = scalar_select %p23, 0, %s22
    %s25 = sadd.s32 1, %s20
    %s26 = scalar_select %p23, %s25, %s20
    %p27 = scmp.ge.s32.totalorder %s26, 2
    %s28 = scalar_select %p27, 0, %s26
    %s29 = smul.u32 %s21, 20
    %s30 = sld [smem:[#allocation5 + %s20]]
    %p31 = scmp.ge.s32.totalorder %s29, %s30
    // Predicated region
    $region9: #{solospeech_disc_forward.3} parent=5 // pred_check
      %p32 = pneg %p31
    $region10: #{solospeech_disc_forward.3} parent=5 // pred_check_branch
      %34 = sbr.rel (%p32) target = $region12
    $region11: #{solospeech_disc_forward.3} parent=5 // pred_region
      %35 = vst [vmem:[#allocation2] sm:$0xff] 0.0
      %36 = vst [vmem:[#allocation2 + $0x8] sm:$0xff] 0.0
      %37 = vst [vmem:[#allocation2 + $0x10] sm:$0xf] 0.0
      %s38 = smul.u32 %s20, 24
      %s39 = sadd.s32 %s29, %s38
      %s40 = scalar_lea.vmem %s3, %s39
      %p42 = scmp.lt.u32.totalorder 20, 8
      %p43 = pneg %p42
      // Predicated region
      $region13: #{solospeech_disc_forward.3} parent=11 // pred_check
        _
      $region14: #{solospeech_disc_forward.3} parent=11 // pred_check_branch
        %45 = sbr.rel (%p42) target = $region16
      $region15: #{solospeech_disc_forward.3} parent=11 // pred_region
        %s60 = sand.u32 20, 7
        %p61 = scmp.eq.s32.totalorder %s60, 0
        %p62 = pneg %p61
        // Predicated region
        $region28: #{solospeech_disc_forward.3} parent=15 // pred_check
          _
        $region29: #{solospeech_disc_forward.3} parent=15 // pred_check_branch
          %64 = sbr.rel (%p61) target = $region31
        $region30: #{solospeech_disc_forward.3} parent=15 // pred_region
          %s65 = sand.u32 20, 7
          %s66 = ssub.s32 20, %s65
          %s67 = scalar_lea.vmem [#allocation2], %s66
          %s68 = ssub.s32 20, %s65
          %s69 = scalar_lea.vmem %s40, %s68
          loop: start=0, step=1, limit=1
          $region32: #{solospeech_disc_forward.3} parent=30 // loop_pre_header
            _
          $region33: #{solospeech_disc_forward.3} parent=30 // loop_header
            %s71 = sphi 0, %s75
            %p72 = scmp.ge.s32.totalorder %s71, 1
            %s76 = sphi [#allocation2], [#allocation2]
            %s77 = sphi %s40, %s40
          $region34: #{solospeech_disc_forward.3} parent=30 // loop_header_branch
            %74 = sbr.rel (%p72) target = $region38
          $region35: #{solospeech_disc_forward.3} parent=30 // loop_body
            %v78 = vld [vmem:[%s76] sm:$0xff]
            %79 = vst [vmem:[%s77] sm:$0xff] %v78
            %v80 = vld [vmem:[%s76 + $0x8] sm:$0xff]
            %81 = vst [vmem:[%s77 + $0x8] sm:$0xff] %v80
          $region36: #{solospeech_disc_forward.3} parent=30 // loop_footer
            %s75 = sadd.s32 1, %s71
          $region37: #{solospeech_disc_forward.3} parent=30 // loop_footer_branch
            %70 = sbr.rel target = $region33
          $region38: #{solospeech_disc_forward.3} parent=30 // loop_exit
            _
          %s82 = sshllo.u32 0, %s65
          loop: start=0, step=1, limit=1
          $region39: #{solospeech_disc_forward.3} parent=30 // loop_pre_header
            _
          $region40: #{solospeech_disc_forward.3} parent=30 // loop_header
            %s84 = sphi 0, %s88
            %p85 = scmp.ge.s32.totalorder %s84, 1
            %s89 = sphi %s67, %s67
            %s90 = sphi %s69, %s69
          $region41: #{solospeech_disc_forward.3} parent=30 // loop_header_branch
            %87 = sbr.rel (%p85) target = $region45
          $region42: #{solospeech_disc_forward.3} parent=30 // loop_body
            %v91 = vld [vmem:[%s89] sm:%s82]
            %92 = vst [vmem:[%s90] sm:%s82] %v91
          $region43: #{solospeech_disc_forward.3} parent=30 // loop_footer
            %s88 = sadd.s32 1, %s84
          $region44: #{solospeech_disc_forward.3} parent=30 // loop_footer_branch
            %83 = sbr.rel target = $region40
          $region45: #{solospeech_disc_forward.3} parent=30 // loop_exit
            _
        $region31: #{solospeech_disc_forward.3} parent=15 // pred_fallthru
          _
      $region16: #{solospeech_disc_forward.3} parent=11 // pred_fallthru
        _
      // Predicated region
      $region17: #{solospeech_disc_forward.3} parent=11 // pred_check
        %p46 = pneg %p42
      $region18: #{solospeech_disc_forward.3} parent=11 // pred_check_branch
        %48 = sbr.rel (%p46) target = $region20
      $region19: #{solospeech_disc_forward.3} parent=11 // pred_region
        %s49 = sshllo.u32 0, 20
        loop: start=0, step=1, limit=1
        $region21: #{solospeech_disc_forward.3} parent=19 // loop_pre_header
          _
        $region22: #{solospeech_disc_forward.3} parent=19 // loop_header
          %s51 = sphi 0, %s55
          %p52 = scmp.ge.s32.totalorder %s51, 1
          %s56 = sphi [#allocation2], [#allocation2]
          %s57 = sphi %s40, %s40
        $region23: #{solospeech_disc_forward.3} parent=19 // loop_header_branch
          %54 = sbr.rel (%p52) target = $region27
        $region24: #{solospeech_disc_forward.3} parent=19 // loop_body
          %v58 = vld [vmem:[%s56] sm:%s49]
          %59 = vst [vmem:[%s57] sm:%s49] %v58
        $region25: #{solospeech_disc_forward.3} parent=19 // loop_footer
          %s55 = sadd.s32 1, %s51
        $region26: #{solospeech_disc_forward.3} parent=19 // loop_footer_branch
          %50 = sbr.rel target = $region22
        $region27: #{solospeech_disc_forward.3} parent=19 // loop_exit
          _
      $region20: #{solospeech_disc_forward.3} parent=11 // pred_fallthru
        _
      // Predicated region
      $region46: #{solospeech_disc_forward.3} parent=11 // pred_check
        _
      $region47: #{solospeech_disc_forward.3} parent=11 // pred_check_branch
        %95 = sbr.rel (0) target = $region49
      $region48: #{solospeech_disc_forward.3} parent=11 // pred_region
        %96 = vsyncadd [#allocation3], 320
      $region49: #{solospeech_disc_forward.3} parent=11 // pred_fallthru
        _
      %s97 = smul.u32 20, 1
      %s98 = sshll.u32 %s97, 4
      %99 = dma.done [#allocation3], %s98
    $region12: #{solospeech_disc_forward.3} parent=5 // pred_fallthru
      _
    %p100 = scmp.lt.s32.totalorder %s29, %s30
    %s101 = sadd.s32 %s29, 20
    %p102 = scmp.gt.s32.totalorder %s101, %s30
    %p103 = pnand %p100, %p102
    %p104 = pneg %p103
    // Predicated region
    $region50: #{solospeech_disc_forward.3} parent=5 // pred_check
      _
    $region51: #{solospeech_disc_forward.3} parent=5 // pred_check_branch
      %106 = sbr.rel (%p103) target = $region53
    $region52: #{solospeech_disc_forward.3} parent=5 // pred_region
      %s107 = smul.u32 %s20, 24
      %s108 = sadd.s32 %s29, %s107
      %s109 = scalar_lea.vmem %s1, %s108
      %p111 = scmp.lt.u32.totalorder 20, 8
      %p112 = pneg %p111
      // Predicated region
      $region54: #{solospeech_disc_forward.3} parent=52 // pred_check
        _
      $region55: #{solospeech_disc_forward.3} parent=52 // pred_check_branch
        %114 = sbr.rel (%p111) target = $region57
      $region56: #{solospeech_disc_forward.3} parent=52 // pred_region
        %s129 = sand.u32 20, 7
        %p130 = scmp.eq.s32.totalorder %s129, 0
        %p131 = pneg %p130
        // Predicated region
        $region69: #{solospeech_disc_forward.3} parent=56 // pred_check
          _
        $region70: #{solospeech_disc_forward.3} parent=56 // pred_check_branch
          %133 = sbr.rel (%p130) target = $region72
        $region71: #{solospeech_disc_forward.3} parent=56 // pred_region
          %s134 = sand.u32 20, 7
          %s135 = ssub.s32 20, %s134
          %s136 = scalar_lea.vmem %s109, %s135
          %s137 = ssub.s32 20, %s134
          %s138 = scalar_lea.vmem [#allocation2], %s137
          loop: start=0, step=1, limit=1
          $region73: #{solospeech_disc_forward.3} parent=71 // loop_pre_header
            _
          $region74: #{solospeech_disc_forward.3} parent=71 // loop_header
            %s140 = sphi 0, %s144
            %p141 = scmp.ge.s32.totalorder %s140, 1
            %s145 = sphi %s109, %s109
            %s146 = sphi [#allocation2], [#allocation2]
          $region75: #{solospeech_disc_forward.3} parent=71 // loop_header_branch
            %143 = sbr.rel (%p141) target = $region79
          $region76: #{solospeech_disc_forward.3} parent=71 // loop_body
            %v147 = vld [vmem:[%s145] sm:$0xff]
            %148 = vst [vmem:[%s146] sm:$0xff] %v147
            %v149 = vld [vmem:[%s145 + $0x8] sm:$0xff]
            %150 = vst [vmem:[%s146 + $0x8] sm:$0xff] %v149
          $region77: #{solospeech_disc_forward.3} parent=71 // loop_footer
            %s144 = sadd.s32 1, %s140
          $region78: #{solospeech_disc_forward.3} parent=71 // loop_footer_branch
            %139 = sbr.rel target = $region74
          $region79: #{solospeech_disc_forward.3} parent=71 // loop_exit
            _
          %s151 = sshllo.u32 0, %s134
          loop: start=0, step=1, limit=1
          $region80: #{solospeech_disc_forward.3} parent=71 // loop_pre_header
            _
          $region81: #{solospeech_disc_forward.3} parent=71 // loop_header
            %s153 = sphi 0, %s157
            %p154 = scmp.ge.s32.totalorder %s153, 1
            %s158 = sphi %s136, %s136
            %s159 = sphi %s138, %s138
          $region82: #{solospeech_disc_forward.3} parent=71 // loop_header_branch
            %156 = sbr.rel (%p154) target = $region86
          $region83: #{solospeech_disc_forward.3} parent=71 // loop_body
            %v160 = vld [vmem:[%s158] sm:%s151]
            %161 = vst [vmem:[%s159] sm:%s151] %v160
          $region84: #{solospeech_disc_forward.3} parent=71 // loop_footer
            %s157 = sadd.s32 1, %s153
          $region85: #{solospeech_disc_forward.3} parent=71 // loop_footer_branch
            %152 = sbr.rel target = $region81
          $region86: #{solospeech_disc_forward.3} parent=71 // loop_exit
            _
        $region72: #{solospeech_disc_forward.3} parent=56 // pred_fallthru
          _
      $region57: #{solospeech_disc_forward.3} parent=52 // pred_fallthru
        _
      // Predicated region
      $region58: #{solospeech_disc_forward.3} parent=52 // pred_check
        %p115 = pneg %p111
      $region59: #{solospeech_disc_forward.3} parent=52 // pred_check_branch
        %117 = sbr.rel (%p115) target = $region61
      $region60: #{solospeech_disc_forward.3} parent=52 // pred_region
        %s118 = sshllo.u32 0, 20
        loop: start=0, step=1, limit=1
        $region62: #{solospeech_disc_forward.3} parent=60 // loop_pre_header
          _
        $region63: #{solospeech_disc_forward.3} parent=60 // loop_header
          %s120 = sphi 0, %s124
          %p121 = scmp.ge.s32.totalorder %s120, 1
          %s125 = sphi %s109, %s109
          %s126 = sphi [#allocation2], [#allocation2]
        $region64: #{solospeech_disc_forward.3} parent=60 // loop_header_branch
          %123 = sbr.rel (%p121) target = $region68
        $region65: #{solospeech_disc_forward.3} parent=60 // loop_body
          %v127 = vld [vmem:[%s125] sm:%s118]
          %128 = vst [vmem:[%s126] sm:%s118] %v127
        $region66: #{solospeech_disc_forward.3} parent=60 // loop_footer
          %s124 = sadd.s32 1, %s120
        $region67: #{solospeech_disc_forward.3} parent=60 // loop_footer_branch
          %119 = sbr.rel target = $region63
        $region68: #{solospeech_disc_forward.3} parent=60 // loop_exit
          _
      $region61: #{solospeech_disc_forward.3} parent=52 // pred_fallthru
        _
      // Predicated region
      $region87: #{solospeech_disc_forward.3} parent=52 // pred_check
        _
      $region88: #{solospeech_disc_forward.3} parent=52 // pred_check_branch
        %164 = sbr.rel (0) target = $region90
      $region89: #{solospeech_disc_forward.3} parent=52 // pred_region
        %165 = vsyncadd [#allocation3], 320
      $region90: #{solospeech_disc_forward.3} parent=52 // pred_fallthru
        _
      %s166 = smul.u32 20, 1
      %s167 = sshll.u32 %s166, 4
      %168 = dma.done [#allocation3], %s167
      %v169 = vlaneseq
      %v170 = vshrl.u32 %v169, 7
      %v171 = vadd.s32 %v170, 8
      %v172 = vadd.s32 %v170, 16
      %v173 = vstv %s29
      %v174 = vadd.s32 %v173, %v170
      %v175 = vadd.s32 %v173, %v171
      %v176 = vadd.s32 %v173, %v172
      %v177 = vld [vmem:[#allocation2] sm:$0xff]
      %v178 = vld [vmem:[#allocation2 + $0x8] sm:$0xff]
      %v179 = vld [vmem:[#allocation2 + $0x10] sm:$0xf]
      %v180 = vstv %s30
      %vm181 = vcmp.lt.s32.totalorder %v174, %v180
      %vm182 = vcmp.lt.s32.totalorder %v175, %v180
      %vm183 = vcmp.lt.s32.totalorder %v176, %v180
      %v184 = vsel %vm181, 1, 0
      %v185 = vsel %vm182, 1, 0
      %v186 = vsel %vm183, 1, 0
      %vm187 = vcmp.eq.s32.totalorder %v184, 1
      %vm188 = vcmp.eq.s32.totalorder %v185, 1
      %vm189 = vcmp.eq.s32.totalorder %v186, 1
      %v190 = vsel %vm187, %v177, 0.0
      %v191 = vsel %vm188, %v178, 0.0
      %v192 = vsel %vm189, %v179, 0.0
      %193 = vst [vmem:[#allocation2] sm:$0xff] %v190
      %194 = vst [vmem:[#allocation2 + $0x8] sm:$0xff] %v191
      %195 = vst [vmem:[#allocation2 + $0x10] sm:$0xf] %v192
      %s196 = scalar_lea.vmem %s3, %s108
      %p198 = scmp.lt.u32.totalorder 20, 8
      %p199 = pneg %p198
      // Predicated region
      $region91: #{solospeech_disc_forward.3} parent=52 // pred_check
        _
      $region92: #{solospeech_disc_forward.3} parent=52 // pred_check_branch
        %201 = sbr.rel (%p198) target = $region94
      $region93: #{solospeech_disc_forward.3} parent=52 // pred_region
        %s216 = sand.u32 20, 7
        %p217 = scmp.eq.s32.totalorder %s216, 0
        %p218 = pneg %p217
        // Predicated region
        $region106: #{solospeech_disc_forward.3} parent=93 // pred_check
          _
        $region107: #{solospeech_disc_forward.3} parent=93 // pred_check_branch
          %220 = sbr.rel (%p217) target = $region109
        $region108: #{solospeech_disc_forward.3} parent=93 // pred_region
          %s221 = sand.u32 20, 7
          %s222 = ssub.s32 20, %s221
          %s223 = scalar_lea.vmem [#allocation2], %s222
          %s224 = ssub.s32 20, %s221
          %s225 = scalar_lea.vmem %s196, %s224
          loop: start=0, step=1, limit=1
          $region110: #{solospeech_disc_forward.3} parent=108 // loop_pre_header
            _
          $region111: #{solospeech_disc_forward.3} parent=108 // loop_header
            %s227 = sphi 0, %s231
            %p228 = scmp.ge.s32.totalorder %s227, 1
            %s232 = sphi [#allocation2], [#allocation2]
            %s233 = sphi %s196, %s196
          $region112: #{solospeech_disc_forward.3} parent=108 // loop_header_branch
            %230 = sbr.rel (%p228) target = $region116
          $region113: #{solospeech_disc_forward.3} parent=108 // loop_body
            %v234 = vld [vmem:[%s232] sm:$0xff]
            %235 = vst [vmem:[%s233] sm:$0xff] %v234
            %v236 = vld [vmem:[%s232 + $0x8] sm:$0xff]
            %237 = vst [vmem:[%s233 + $0x8] sm:$0xff] %v236
          $region114: #{solospeech_disc_forward.3} parent=108 // loop_footer
            %s231 = sadd.s32 1, %s227
          $region115: #{solospeech_disc_forward.3} parent=108 // loop_footer_branch
            %226 = sbr.rel target = $region111
          $region116: #{solospeech_disc_forward.3} parent=108 // loop_exit
            _
          %s238 = sshllo.u32 0, %s221
          loop: start=0, step=1, limit=1
          $region117: #{solospeech_disc_forward.3} parent=108 // loop_pre_header
            _
          $region118: #{solospeech_disc_forward.3} parent=108 // loop_header
            %s240 = sphi 0, %s244
            %p241 = scmp.ge.s32.totalorder %s240, 1
            %s245 = sphi %s223, %s223
            %s246 = sphi %s225, %s225
          $region119: #{solospeech_disc_forward.3} parent=108 // loop_header_branch
            %243 = sbr.rel (%p241) target = $region123
          $region120: #{solospeech_disc_forward.3} parent=108 // loop_body
            %v247 = vld [vmem:[%s245] sm:%s238]
            %248 = vst [vmem:[%s246] sm:%s238] %v247
          $region121: #{solospeech_disc_forward.3} parent=108 // loop_footer
            %s244 = sadd.s32 1, %s240
          $region122: #{solospeech_disc_forward.3} parent=108 // loop_footer_branch
            %239 = sbr.rel target = $region118
          $region123: #{solospeech_disc_forward.3} parent=108 // loop_exit
            _
        $region109: #{solospeech_disc_forward.3} parent=93 // pred_fallthru
          _
      $region94: #{solospeech_disc_forward.3} parent=52 // pred_fallthru
        _
      // Predicated region
      $region95: #{solospeech_disc_forward.3} parent=52 // pred_check
        %p202 = pneg %p198
      $region96: #{solospeech_disc_forward.3} parent=52 // pred_check_branch
        %204 = sbr.rel (%p202) target = $region98
      $region97: #{solospeech_disc_forward.3} parent=52 // pred_region
        %s205 = sshllo.u32 0, 20
        loop: start=0, step=1, limit=1
        $region99: #{solospeech_disc_forward.3} parent=97 // loop_pre_header
          _
        $region100: #{solospeech_disc_forward.3} parent=97 // loop_header
          %s207 = sphi 0, %s211
          %p208 = scmp.ge.s32.totalorder %s207, 1
          %s212 = sphi [#allocation2], [#allocation2]
          %s213 = sphi %s196, %s196
        $region101: #{solospeech_disc_forward.3} parent=97 // loop_header_branch
          %210 = sbr.rel (%p208) target = $region105
        $region102: #{solospeech_disc_forward.3} parent=97 // loop_body
          %v214 = vld [vmem:[%s212] sm:%s205]
          %215 = vst [vmem:[%s213] sm:%s205] %v214
        $region103: #{solospeech_disc_forward.3} parent=97 // loop_footer
          %s211 = sadd.s32 1, %s207
        $region104: #{solospeech_disc_forward.3} parent=97 // loop_footer_branch
          %206 = sbr.rel target = $region100
        $region105: #{solospeech_disc_forward.3} parent=97 // loop_exit
          _
      $region98: #{solospeech_disc_forward.3} parent=52 // pred_fallthru
        _
      // Predicated region
      $region124: #{solospeech_disc_forward.3} parent=52 // pred_check
        _
      $region125: #{solospeech_disc_forward.3} parent=52 // pred_check_branch
        %251 = sbr.rel (0) target = $region127
      $region126: #{solospeech_disc_forward.3} parent=52 // pred_region
        %252 = vsyncadd [#allocation3], 320
      $region127: #{solospeech_disc_forward.3} parent=52 // pred_fallthru
        _
      %s253 = sshll.u32 %s166, 4
      %254 = dma.done [#allocation3], %s253
    $region53: #{solospeech_disc_forward.3} parent=5 // pred_fallthru
      _
  $region6: #{solospeech_disc_forward.3} parent=0 // loop_footer
    %s19 = sadd.s32 1, %s15
  $region7: #{solospeech_disc_forward.3} parent=0 // loop_footer_branch
    %14 = sbr.rel target = $region3
  $region8: #{solospeech_disc_forward.3} parent=0 // loop_exit
    _
  %255 = vsyncmov [#allocation3]
  %s256 = vpop.sfrf %255
  %p257 = scmp.eq.s32.totalorder %s256, 0
  %p258 = pneg %p257
  %260 = shalt.err (%p258)

</llo_original>
